<compile_context>
chip_gen: v7x
topology: tpu7x:2x2x1
jax: 0.10.0
libtpu: 0.0.40
codegen_flags: <defaults>
</compile_context>

<pallas_src>
import functools

import jax
import jax.numpy as jnp
from jax import lax
from jax.experimental import pallas as pl
from jax.experimental.pallas import tpu as pltpu


def _round_up(x, m):
    return (x + m - 1) // m * m


def _vmem_budget_bytes(frac=0.75):
    """~frac of per-core VMEM capacity (chip-derived, safe fallback)."""
    cap = None
    try:
        cap = getattr(pltpu.get_tpu_info(), "vmem_capacity_bytes", None)
    except Exception:
        cap = None
    if not cap:
        cap = 64 << 20          # conservative fallback: v7x per-TensorCore VMEM
    return max(32 << 20, int(cap * frac))


def _pick_row_block(cp, cap=512):
    """Row block for the softmax finalize: <= cap rows, divides cp."""
    if cp <= cap:
        return cp
    for rb in (512, 256, 128, 64, 32, 16, 8):
        if rb <= cap and cp % rb == 0:
            return rb
    return cp


def _pick_spatial_tile(np_pad, cp, x_itemsize, a_itemsize, budget, max_tile):
    """Largest multiple of 128 dividing np_pad (<= max_tile) whose two-pass
    VMEM footprint fits the budget."""
    rb = _pick_row_block(cp)

    def need(tn):
        p1 = (2 * cp * tn * x_itemsize        # double-buffered X tiles
              + 2 * cp * cp * a_itemsize      # double-buffered attn output block
              + cp * cp * 4                   # f32 Gram accumulator
              + 3 * rb * cp * 4               # finalize temps (one row block)
              + (2 << 20))
        p2 = (2 * cp * tn * x_itemsize        # X tiles
              + 2 * cp * tn * x_itemsize      # output tiles
              + 2 * cp * cp * a_itemsize      # attn block
              + cp * tn * 4                   # f32 matmul result
              + (2 << 20))
        return max(p1, p2)

    best = 128
    t = 128
    while t <= min(np_pad, max_tile):
        if np_pad % t == 0 and need(t) <= budget:
            best = t
        t += 128
    return best


def _finalize_softmax_rows(energy_rows, c_valid):
    """softmax(rowmax(E) - E) == softmax(-E) restricted to the first c_valid
    columns, with a single (valid-only) row-min as the stability shift."""
    cp = energy_rows.shape[-1]
    e = energy_rows
    if c_valid < cp:
        # Padded channel columns must pollute neither the row-min shift nor
        # the denominator: push them to +inf so exp(shift - e) becomes 0.
        col = lax.broadcasted_iota(jnp.int32, e.shape, 1)
        e = jnp.where(col < c_valid, e, jnp.inf)
    shift = jnp.min(e, axis=-1, keepdims=True)        # stable shift for softmax(-E)
    p = jnp.exp(shift - e)                            # padded cols -> exp(-inf) = 0
    denom = jnp.sum(p, axis=-1, keepdims=True)        # >= 1 (the min column gives 1)
    return p * pl.reciprocal(denom, approx=True)


# --------------------------------------------------------------------------- #
# Fused single-pass kernel: one padded batch element resident in VMEM.
# --------------------------------------------------------------------------- #
def _cam_fused_kernel(gamma_ref, x_ref, out_ref, *, c_valid, mxu_dtype):
    x = x_ref[0]                                      # (Cp, Np), input dtype
    xb = x.astype(mxu_dtype)                          # bf16 MXU operands
    energy = lax.dot_general(
        xb, xb, (((1,), (1,)), ((), ())),
        preferred_element_type=jnp.float32)           # (Cp, Cp) f32
    attn = _finalize_softmax_rows(energy, c_valid).astype(mxu_dtype)
    out = lax.dot_general(
        attn, xb, (((1,), (0,)), ((), ())),
        preferred_element_type=jnp.float32)           # (Cp, Np) f32
    out_ref[0] = (gamma_ref[0] * out + x.astype(jnp.float32)).astype(out_ref.dtype)


# --------------------------------------------------------------------------- #
# Pass 1 (tiled path): attention = softmax over the channel Gram matrix.
# --------------------------------------------------------------------------- #
def _cam_attention_kernel(x_ref, attn_ref, energy_acc, *,
                          c_valid, row_block, mxu_dtype):
    # x_ref      : VMEM (1, Cp, tn)   one spatial tile of one batch element
    # attn_ref   : VMEM (1, Cp, Cp)   attention output (resident across k)
    # energy_acc : VMEM (Cp, Cp) f32  Gram-matrix accumulator
    k = pl.program_id(1)

    @pl.when(k == 0)
    def _():
        energy_acc[...] = jnp.zeros_like(energy_acc)

    xb = x_ref[0].astype(mxu_dtype)                   # bf16 operands, f32 acc
    energy_acc[...] += lax.dot_general(
        xb, xb, (((1,), (1,)), ((), ())),
        preferred_element_type=jnp.float32)

    @pl.when(k == pl.num_programs(1) - 1)
    def _():
        cp = energy_acc.shape[0]
        if row_block >= cp:
            attn_ref[0] = _finalize_softmax_rows(
                energy_acc[...], c_valid).astype(attn_ref.dtype)
        else:
            # Row-blocked finalize keeps f32 temps bounded for large Cp.
            num_blocks = cp // row_block

            def body(r, carry):
                off = pl.multiple_of(r * row_block, row_block)
                rows = _finalize_softmax_rows(
                    energy_acc[pl.ds(off, row_block), :], c_valid)
                attn_ref[0, pl.ds(off, row_block), :] = rows.astype(attn_ref.dtype)
                return carry

            lax.fori_loop(0, num_blocks, body, 0)


# --------------------------------------------------------------------------- #
# Pass 2 (tiled path): out = gamma * (attn @ X) + X, lane-dense stores.
# --------------------------------------------------------------------------- #
def _cam_apply_kernel(gamma_ref, attn_ref, x_ref, out_ref, *, mxu_dtype):
    # gamma_ref : SMEM (1,) f32
    # attn_ref  : VMEM (1, Cp, Cp) mxu_dtype
    # x_ref     : VMEM (1, Cp, tn) input dtype
    x = x_ref[0]
    out = lax.dot_general(
        attn_ref[0], x.astype(mxu_dtype), (((1,), (0,)), ((), ())),
        preferred_element_type=jnp.float32)
    out_ref[0] = (gamma_ref[0] * out + x.astype(jnp.float32)).astype(out_ref.dtype)


def cam_forward(x, gamma, *, max_spatial_tile=2048, allow_fused=True,
                mxu_dtype=None):
    """CAM forward.  x: (B, C, H, W); gamma: (1,) float32. Returns (B, C, H, W)."""
    B, C, H, W = x.shape
    N = H * W

    if mxu_dtype is None:
        mxu_dtype = jnp.bfloat16 if x.dtype == jnp.float32 else x.dtype
    x_itemsize = jnp.dtype(x.dtype).itemsize
    a_itemsize = jnp.dtype(mxu_dtype).itemsize

    sublane = max(8, 32 // min(x_itemsize, a_itemsize))
    Cp = _round_up(C, sublane)
    Np = _round_up(N, 128)

    xr = x.reshape(B, C, N)
    if (Cp, Np) != (C, N):
        xr = jnp.pad(xr, ((0, 0), (0, Cp - C), (0, Np - N)))
    gamma = jnp.asarray(gamma, jnp.float32).reshape((1,))

    budget = _vmem_budget_bytes()
    x_bytes = B * Cp * Np * x_itemsize
    attn_bytes = B * Cp * Cp * a_itemsize

    # ------------------ fused path: X resident in VMEM -------------------- #
    fused_need = (4 * Cp * Np * x_itemsize       # in + out, double-buffered
                  + Cp * Np * (4 + a_itemsize)   # f32 result + bf16 operand copy
                  + 4 * Cp * Cp * 4               # Gram + softmax temps
                  + (2 << 20))
    if allow_fused and fused_need <= budget:
        out = pl.pallas_call(
            functools.partial(_cam_fused_kernel, c_valid=C, mxu_dtype=mxu_dtype),
            out_shape=jax.ShapeDtypeStruct((B, Cp, Np), x.dtype),
            grid_spec=pl.GridSpec(
                grid=(B,),
                in_specs=[
                    pl.BlockSpec(memory_space=pltpu.MemorySpace.SMEM),    # gamma
                    pl.BlockSpec((1, Cp, Np), lambda b: (b, 0, 0)),       # x
                ],
                out_specs=pl.BlockSpec((1, Cp, Np), lambda b: (b, 0, 0)),
            ),
            compiler_params=pltpu.CompilerParams(
                dimension_semantics=("parallel",),
                vmem_limit_bytes=budget),
            cost_estimate=pl.CostEstimate(
                flops=4 * B * Cp * Cp * Np,
                transcendentals=B * Cp * Cp,
                bytes_accessed=2 * x_bytes),
        )(gamma, xr)
        return out[:, :C, :N].reshape(B, C, H, W)

    # ---------------------- two-pass tiled path --------------------------- #
    tn = _pick_spatial_tile(Np, Cp, x_itemsize, a_itemsize, budget,
                            max_spatial_tile)
    n_tiles = Np // tn
    row_block = _pick_row_block(Cp)

    # Pass 1: attention (Gram accumulation over spatial tiles, then softmax).
    attn = pl.pallas_call(
        functools.partial(_cam_attention_kernel, c_valid=C,
                          row_block=row_block, mxu_dtype=mxu_dtype),
        out_shape=jax.ShapeDtypeStruct((B, Cp, Cp), mxu_dtype),
        grid_spec=pltpu.PrefetchScalarGridSpec(
            num_scalar_prefetch=0,
            grid=(B, n_tiles),
            in_specs=[pl.BlockSpec((1, Cp, tn), lambda b, k: (b, 0, k))],
            out_specs=pl.BlockSpec((1, Cp, Cp), lambda b, k: (b, 0, 0)),
            scratch_shapes=[pltpu.VMEM((Cp, Cp), jnp.float32)],
        ),
        compiler_params=pltpu.CompilerParams(
            dimension_semantics=("parallel", "arbitrary"),
            vmem_limit_bytes=budget),
        cost_estimate=pl.CostEstimate(
            flops=2 * B * Cp * Cp * Np,
            transcendentals=B * Cp * Cp,
            bytes_accessed=x_bytes + attn_bytes),
    )(xr)

    # Pass 2: out = gamma * (attn @ X) + X.
    out = pl.pallas_call(
        functools.partial(_cam_apply_kernel, mxu_dtype=mxu_dtype),
        out_shape=jax.ShapeDtypeStruct((B, Cp, Np), x.dtype),
        grid_spec=pl.GridSpec(
            grid=(B, n_tiles),
            in_specs=[
                pl.BlockSpec(memory_space=pltpu.MemorySpace.SMEM),        # gamma
                pl.BlockSpec((1, Cp, Cp), lambda b, j: (b, 0, 0)),        # attn
                pl.BlockSpec((1, Cp, tn), lambda b, j: (b, 0, j)),        # x tile
            ],
            out_specs=pl.BlockSpec((1, Cp, tn), lambda b, j: (b, 0, j)),
        ),
        compiler_params=pltpu.CompilerParams(
            dimension_semantics=("parallel", "parallel"),
            vmem_limit_bytes=budget),
        cost_estimate=pl.CostEstimate(
            flops=2 * B * Cp * Cp * Np + 3 * B * Cp * Np,
            transcendentals=0,
            bytes_accessed=2 * x_bytes + attn_bytes),
    )(gamma, attn, xr)

    return out[:, :C, :N].reshape(B, C, H, W)


def cam_reference(x, gamma, operand_dtype=None):
    """Pure-JAX reference of the PyTorch forward (f32 math).  If operand_dtype
    is given, the matmul operands are pre-rounded to it (mirrors the kernel's
    bf16 MXU operands) while everything else stays f32."""
    B, C, H, W = x.shape
    xf = x.reshape(B, C, H * W).astype(jnp.float32)
    q = xf if operand_dtype is None else xf.astype(operand_dtype).astype(jnp.float32)
    energy = jnp.einsum('bcn,bdn->bcd', q, q, precision=lax.Precision.HIGHEST)
    energy_new = jnp.max(energy, axis=-1, keepdims=True) - energy
    attn = jax.nn.softmax(energy_new, axis=-1)
    out = jnp.einsum('bcd,bdn->bcn', attn, q, precision=lax.Precision.HIGHEST)
    g = jnp.asarray(gamma, jnp.float32).ravel()[0]
    return (g * out + xf).reshape(B, C, H, W).astype(x.dtype)


if __name__ == "__main__":
    key = jax.random.PRNGKey(0)

    # Case 1: module-init gamma (zeros) -> output must equal the input exactly.
    B, C, H, W = 2, 4, 16, 16
    x1 = jax.random.normal(key, (B, C, H, W), dtype=jnp.float32)
    g0 = jnp.zeros((1,), dtype=jnp.float32)
    out1 = jax.block_until_ready(cam_forward(x1, g0))
    assert out1.shape == (B, C, H, W)
    assert jnp.allclose(out1, cam_reference(x1, g0), atol=1e-5, rtol=1e-5)

    # Case 2: non-zero gamma, fused (X-resident) path, bf16 MXU operands.
    g1 = jnp.full((1,), 0.5, dtype=jnp.float32)
    out2 = jax.block_until_ready(cam_forward(x1, g1))
    assert jnp.allclose(out2, cam_reference(x1, g1), atol=1e-2, rtol=1e-2)

    # Case 3: tiled two-pass path -- non-lane-aligned spatial size, padded
    # channels, multi-tile Gram accumulation.
    x3 = jax.random.normal(jax.random.fold_in(key, 1), (2, 6, 20, 20),
                           dtype=jnp.float32)
    g2 = jnp.full((1,), 0.8, dtype=jnp.float32)
    out3 = jax.block_until_ready(
        cam_forward(x3, g2, allow_fused=False, max_spatial_tile=128))
    assert out3.shape == x3.shape
    assert jnp.allclose(out3, cam_reference(x3, g2), atol=1e-2, rtol=1e-2)

    # Case 4: all-positive (post-ReLU-like) features with padded channels --
    # the configuration where the old row-min shift produced NaNs.  Compare
    # against a reference that also rounds the matmul operands to bf16.
    x4 = jnp.abs(jax.random.normal(jax.random.fold_in(key, 2),
                                   (1, 6, 16, 16), dtype=jnp.float32)) + 0.5
    g3 = jnp.ones((1,), dtype=jnp.float32)
    ref4 = cam_reference(x4, g3, operand_dtype=jnp.bfloat16)
    out4a = jax.block_until_ready(
        cam_forward(x4, g3, allow_fused=False, max_spatial_tile=128))   # tiled
    out4b = jax.block_until_ready(cam_forward(x4, g3))                  # fused
    for o in (out4a, out4b):
        assert bool(jnp.all(jnp.isfinite(o)))
        assert jnp.allclose(o, ref4, atol=2e-2, rtol=2e-2)

    # Case 5: small-magnitude features -> non-degenerate (spread-out) softmax.
    x5 = 0.1 * x1
    out5 = jax.block_until_ready(cam_forward(x5, g3))
    assert jnp.allclose(out5, cam_reference(x5, g3), atol=1e-2, rtol=1e-2)

    print("KERNEL_OK")
</pallas_src>

<mosaic_0001>
module attributes {stable_mosaic.version = 11 : i64} {
  func.func @_cam_fused_kernel(%arg0: i32, %arg1: memref<1xf32, #tpu.memory_space<smem>>, %arg2: memref<1x16x256xf32, #tpu.memory_space<vmem>>, %arg3: memref<1x16x256xf32, #tpu.memory_space<vmem>>) attributes {dimension_semantics = [#tpu.dimension_semantics<parallel>], iteration_bounds = array<i64: 2>, scalar_prefetch = 0 : i64, scratch_operands = 0 : i64, tpu.core_type = #tpu.core_type<tc>, window_params = [{transform_indices = @transform_0, window_bounds = array<i64: 1>}, {transform_indices = @transform_1, window_bounds = array<i64: 1, 16, 256>}, {transform_indices = @transform_2, window_bounds = array<i64: 1, 16, 256>}]} {
    %c0 = arith.constant 0 : index
    %c0_0 = arith.constant 0 : index
    %c0_1 = arith.constant 0 : index
    %0 = vector.load %arg2[%c0, %c0_0, %c0_1] : memref<1x16x256xf32, #tpu.memory_space<vmem>>, vector<1x16x256xf32>
    %1 = vector.shape_cast %0 : vector<1x16x256xf32> to vector<16x256xf32>
    %2 = arith.truncf %1 : vector<16x256xf32> to vector<16x256xbf16>
    %cst = arith.constant dense<0.000000e+00> : vector<16x16xf32>
    %3 = tpu.matmul %2, %2, %cst {dimension_numbers = #tpu.dot_dimension_numbers<[1], [1], [0], [0], [0, 0, 1, 0], [], []>} : vector<16x256xbf16>, vector<16x256xbf16>, vector<16x16xf32> -> vector<16x16xf32>
    %4 = tpu.iota {dimensions = array<i32: 1>} : vector<16x16xi32>
    %c4_i32 = arith.constant 4 : i32
    %5 = vector.broadcast %c4_i32 : i32 to vector<16x16xi32>
    %6 = arith.cmpi slt, %4, %5 : vector<16x16xi32>
    %cst_2 = arith.constant 0x7F800000 : f32
    %7 = vector.broadcast %cst_2 : f32 to vector<16x16xf32>
    %8 = arith.select %6, %3, %7 : vector<16x16xi1>, vector<16x16xf32>
    %cst_3 = arith.constant dense<0x7F800000> : vector<16xf32>
    %9 = vector.multi_reduction <minimumf>, %8, %cst_3 [1] : vector<16x16xf32> to vector<16xf32>
    %10 = vector.shape_cast %9 : vector<16xf32> to vector<16x1xf32>
    %11 = vector.broadcast %10 : vector<16x1xf32> to vector<16x16xf32>
    %12 = arith.subf %11, %8 : vector<16x16xf32>
    %13 = math.exp %12 : vector<16x16xf32>
    %cst_4 = arith.constant dense<0.000000e+00> : vector<16xf32>
    %14 = vector.multi_reduction <add>, %13, %cst_4 [1] : vector<16x16xf32> to vector<16xf32>
    %15 = vector.shape_cast %14 : vector<16xf32> to vector<16x1xf32>
    %16 = tpu.reciprocal %15 {approx = true} : vector<16x1xf32> -> vector<16x1xf32>
    %17 = vector.broadcast %16 : vector<16x1xf32> to vector<16x16xf32>
    %18 = arith.mulf %13, %17 : vector<16x16xf32>
    %19 = arith.truncf %18 : vector<16x16xf32> to vector<16x16xbf16>
    %cst_5 = arith.constant dense<0.000000e+00> : vector<16x256xf32>
    %20 = tpu.matmul %19, %2, %cst_5 {dimension_numbers = #tpu.dot_dimension_numbers<[1], [0], [0], [1], [0, 0, 1, 1], [], []>} : vector<16x16xbf16>, vector<16x256xbf16>, vector<16x256xf32> -> vector<16x256xf32>
    %c0_6 = arith.constant 0 : index
    %21 = memref.load %arg1[%c0_6] : memref<1xf32, #tpu.memory_space<smem>>
    %22 = vector.broadcast %21 : f32 to vector<16x256xf32>
    %23 = arith.mulf %22, %20 : vector<16x256xf32>
    %24 = arith.addf %23, %1 : vector<16x256xf32>
    %c0_7 = arith.constant 0 : index
    %c0_8 = arith.constant 0 : index
    %c0_9 = arith.constant 0 : index
    %25 = vector.load %arg3[%c0_7, %c0_8, %c0_9] : memref<1x16x256xf32, #tpu.memory_space<vmem>>, vector<1x16x256xf32>
    %26 = vector.shape_cast %25 : vector<1x16x256xf32> to vector<16x256xf32>
    %27 = vector.shape_cast %24 : vector<16x256xf32> to vector<1x16x256xf32>
    tpu.vector_store %arg3[%c0_7, %c0_8, %c0_9], %27 {strides = array<i32>} : memref<1x16x256xf32, #tpu.memory_space<vmem>>, vector<1x16x256xf32>,
    return
  }
  func.func @transform_0(%arg0: i32) -> i32 {
    %c0_i32 = arith.constant 0 : i32
    %c0_i32_0 = arith.constant 0 : i32
    return %c0_i32 : i32
  }
  func.func @transform_1(%arg0: i32) -> (i32, i32, i32) {
    %c0_i32 = arith.constant 0 : i32
    %c0_i32_0 = arith.constant 0 : i32
    %c0_i32_1 = arith.constant 0 : i32
    return %arg0, %c0_i32, %c0_i32_0 : i32, i32, i32
  }
  func.func @transform_2(%arg0: i32) -> (i32, i32, i32) {
    %c0_i32 = arith.constant 0 : i32
    %c0_i32_0 = arith.constant 0 : i32
    %c0_i32_1 = arith.constant 0 : i32
    return %arg0, %c0_i32, %c0_i32_0 : i32, i32, i32
  }
}

</mosaic_0001>

<llo_original>
// kernel: tpu_custom_call.1
$region0: #{tpu_custom_call.1}
  #allocation0 [shape = 'u32[]', space=smem, size = 0x4, offset = 0x4, fixed_abs, tag = 'smem constant byte address 0x4 - core index']
  #allocation1 [shape = 'u32[144,128]{1,0:T(1,128)}', space=vmem, size = 0x12000, scoped, tag = 'internal scratch']
  #allocation2 [shape = 'f32[1]{0:T(128)S(6)}', space=smem, size = 0x200, scoped, tag = 'scoped memory for tpu_custom_call.1']
  %s0 = inlined_call_operand.<no memory space> [shape: f32[1], index: 0, kind: input, shape index: {}]
  %s1 = inlined_call_operand.hbm [shape: f32[2,16,256], index: 1, kind: input, shape index: {}]
  %s2 = inlined_call_operand.hbm [shape: f32[2,16,256], index: 2, kind: output, shape index: {}]
  %s3 = sld [smem:[#allocation0]]
  $region45: #{tpu_custom_call.1} parent=0
    _
  %s5 = ssub.s32 1, %s3
  %s6 = scalar_select 0, %s5, %s3
  %7 = sst [smem:[#allocation2]] %s0
  $region1: #{tpu_custom_call.1} parent=0
    #allocation3 [shape = 'u8[32768]{0}', space=vmem, size = 0x8000, scoped, tag = 'input window, operand 1']
    #allocation4 [shape = 's32[2]{0}', space=sflag, size = 0x8, scoped, tag = 'scoped memory for tpu_custom_call.1']
    #allocation5 [shape = 's32[2]{0}', space=sflag, size = 0x8, scoped, tag = 'scoped memory for tpu_custom_call.1']
    #allocation6 [shape = 'u8[32768]{0}', space=vmem, size = 0x8000, scoped, tag = 'output window, operand 0']
    %8 = vsyncpa [#allocation4], 0
    %s9 = scalar_lea.sflag [#allocation4], 1
    %10 = vsyncpa %s9, 0
    %11 = vsyncpa [#allocation5], 0
    %s12 = scalar_lea.sflag [#allocation5], 1
    %13 = vsyncpa %s12, 0
    loop: start=0, step=1, limit=4
    $region2: #{tpu_custom_call.1} parent=1 // loop_pre_header
      _
    $region3: #{tpu_custom_call.1} parent=1 // loop_header
      %s15 = sphi 0, %s19
      %p16 = scmp.ge.s32.totalorder %s15, 4
      %s23 = sphi 0, %s23
      %s25 = sphi 0, %s23
      %s26 = sphi 0, %s25
      %s40 = sphi 0, %s26
      %s46 = sphi 0, %s48
      %s49 = sphi 0, %s46
      %s50 = sphi 0, %s49
      %s66 = sphi 0, %s50
      %s72 = sphi 0, %s74
      %s75 = sphi 0, %s72
      %s76 = sphi 0, %s75
      %s92 = sphi 0, %s76
    $region4: #{tpu_custom_call.1} parent=1 // loop_header_branch
      %18 = sbr.rel (%p16) target = $region8
    $region5: #{tpu_custom_call.1} parent=1 // loop_body
      %s20 = ssub.s32 %s15, 1
      %s21 = ssub.s32 %s15, 2
      %s22 = sadd.s32 %s15, 1
      %s24 = sadd.s32 %s23, 1
      %p27 = scmp.eq.s32.totalorder %s15, 1
      %p28 = scmp.ne.s32.totalorder %s23, %s25
      %p29 = scmp.eq.s32.totalorder %s15, 0
      %p30 = por %p28, %p29
      %p31 = scmp.ne.s32.totalorder %s23, %s25
      %p32 = scmp.eq.s32.totalorder %s20, 1
      %p33 = por %p31, %p32
      %p34 = scmp.ne.s32.totalorder %s25, %s26
      %p35 = scmp.eq.s32.totalorder %s20, 0
      %p36 = por %p34, %p35
      %p37 = scmp.ne.s32.totalorder %s25, %s26
      %p38 = scmp.eq.s32.totalorder %s21, 1
      %p39 = por %p37, %p38
      %p41 = scmp.ne.s32.totalorder %s26, %s40
      %p42 = scmp.eq.s32.totalorder %s21, 0
      %p43 = por %p41, %p42
      %s44 = ssub.s32 %s15, %s22
      %p45 = scmp.eq.s32.totalorder %s44, 0
      %s47 = sadd.s32 %s46, 1
      %s48 = scalar_select %p45, %s46, %s47
      %p51 = pneg %p45
      %p52 = scmp.eq.s32.totalorder %s15, 1
      %p53 = por %p51, %p52
      %p54 = scmp.ne.s32.totalorder %s46, %s49
      %p55 = scmp.eq.s32.totalorder %s15, 0
      %p56 = por %p54, %p55
      %p57 = scmp.ne.s32.totalorder %s46, %s49
      %p58 = scmp.eq.s32.totalorder %s20, 1
      %p59 = por %p57, %p58
      %p60 = scmp.ne.s32.totalorder %s49, %s50
      %p61 = scmp.eq.s32.totalorder %s20, 0
      %p62 = por %p60, %p61
      %p63 = scmp.ne.s32.totalorder %s49, %s50
      %p64 = scmp.eq.s32.totalorder %s21, 1
      %p65 = por %p63, %p64
      %p67 = scmp.ne.s32.totalorder %s50, %s66
      %p68 = scmp.eq.s32.totalorder %s21, 0
      %p69 = por %p67, %p68
      %s70 = ssub.s32 %s15, %s22
      %p71 = scmp.eq.s32.totalorder %s70, 0
      %s73 = sadd.s32 %s72, 1
      %s74 = scalar_select %p71, %s72, %s73
      %p77 = pneg %p71
      %p78 = scmp.eq.s32.totalorder %s15, 1
      %p79 = por %p77, %p78
      %p80 = scmp.ne.s32.totalorder %s72, %s75
      %p81 = scmp.eq.s32.totalorder %s15, 0
      %p82 = por %p80, %p81
      %p83 = scmp.ne.s32.totalorder %s72, %s75
      %p84 = scmp.eq.s32.totalorder %s20, 1
      %p85 = por %p83, %p84
      %p86 = scmp.ne.s32.totalorder %s75, %s76
      %p87 = scmp.eq.s32.totalorder %s20, 0
      %p88 = por %p86, %p87
      %p89 = scmp.ne.s32.totalorder %s75, %s76
      %p90 = scmp.eq.s32.totalorder %s21, 1
      %p91 = por %p89, %p90
      %p93 = scmp.ne.s32.totalorder %s76, %s92
      %p94 = scmp.eq.s32.totalorder %s21, 0
      %p95 = por %p93, %p94
      %p96 = scmp.le.s32.totalorder 1, %s15
      %p97 = scmp.lt.s32.totalorder %s15, 3
      %p98 = pnand %p96, %p97
      %p99 = pneg %p98
      // Predicated region
      $region9: #{tpu_custom_call.1} parent=5 // pred_check
        _
      $region10: #{tpu_custom_call.1} parent=5 // pred_check_branch
        %101 = sbr.rel (%p98) target = $region12
      $region11: #{tpu_custom_call.1} parent=5 // pred_region
        %s102 = ssub.s32 %s15, 1
        // Predicated region
        $region13: #{tpu_custom_call.1} parent=11 // pred_check
          %p103 = pneg %p36
        $region14: #{tpu_custom_call.1} parent=11 // pred_check_branch
          %105 = sbr.rel (%p103) target = $region16
        $region15: #{tpu_custom_call.1} parent=11 // pred_region
          _
        $region16: #{tpu_custom_call.1} parent=11 // pred_fallthru
          _
      $region12: #{tpu_custom_call.1} parent=5 // pred_fallthru
        _
      %p106 = scmp.lt.s32.totalorder %s15, 2
      // Predicated region
      $region17: #{tpu_custom_call.1} parent=5 // pred_check
        %p107 = pneg %p106
      $region18: #{tpu_custom_call.1} parent=5 // pred_check_branch
        %109 = sbr.rel (%p107) target = $region20
      $region19: #{tpu_custom_call.1} parent=5 // pred_region
        // Predicated region
        $region21: #{tpu_custom_call.1} parent=19 // pred_check
          %p110 = pneg %p56
        $region22: #{tpu_custom_call.1} parent=19 // pred_check_branch
          %112 = sbr.rel (%p110) target = $region24
        $region23: #{tpu_custom_call.1} parent=19 // pred_region
          %s113 = sand.u32 %s46, 1
          %s114 = scalar_lea.sflag [#allocation4], %s113
          %s115 = sand.u32 %s46, 1
          %s116 = smul.addr %s115, 32
          %s117 = scalar_lea.vmem [#allocation3], %s116
          %s119 = ssub.s32 512, 512
          %120 = vsyncadd %s114, %s119
          %s121 = smul.addr %s15, 4
          %s122 = smul.addr %s121, 128
          %s123 = scalar_lea.hbm %s1, %s122
          %s124 = sshll.u32 %s117, 4
          %s125 = int_to_ptr.vmem [resolvable:$true] %s124
          %130 = dma.hbm_to_vmem [thread:$0]  %s123, 512, %s125, %s114, 256, 256, 16
        $region24: #{tpu_custom_call.1} parent=19 // pred_fallthru
          _
      $region20: #{tpu_custom_call.1} parent=5 // pred_fallthru
        _
      %p131 = scmp.le.s32.totalorder 1, %s15
      %p132 = scmp.lt.s32.totalorder %s15, 3
      %p133 = pnand %p131, %p132
      %p134 = pneg %p133
      // Predicated region
      $region25: #{tpu_custom_call.1} parent=5 // pred_check
        _
      $region26: #{tpu_custom_call.1} parent=5 // pred_check_branch
        %136 = sbr.rel (%p133) target = $region28
      $region27: #{tpu_custom_call.1} parent=5 // pred_region
        %s137 = ssub.s32 %s15, 1
        %s138 = sand.u32 %s49, 1
        %s139 = scalar_lea.sflag [#allocation4], %s138
        %s140 = sand.u32 %s49, 1
        %s141 = smul.addr %s140, 32
        %s142 = scalar_lea.vmem [#allocation3], %s141
        // Predicated region
        $region29: #{tpu_custom_call.1} parent=27 // pred_check
          %p143 = pneg %p62
        $region30: #{tpu_custom_call.1} parent=27 // pred_check_branch
          %145 = sbr.rel (%p143) target = $region32
        $region31: #{tpu_custom_call.1} parent=27 // pred_region
          %146 = dma.done %s139, 512
        $region32: #{tpu_custom_call.1} parent=27 // pred_fallthru
          _
        %p147 = pneg %p36
        %p148 = pneg %p33
        %s149 = sand.u32 %s49, 1
        %s150 = scalar_lea.sflag [#allocation4], %s149
        %s151 = sand.u32 %s49, 1
        %s152 = smul.addr %s151, 32
        %s153 = scalar_lea.vmem [#allocation3], %s152
        %p154 = pneg %p62
        %p155 = pneg %p59
        %p156 = pneg %p88
        %p157 = pneg %p85
        %s158 = sand.u32 %s75, 1
        %s159 = scalar_lea.sflag [#allocation5], %s158
        %s160 = sand.u32 %s75, 1
        %s161 = smul.addr %s160, 32
        %s162 = scalar_lea.vmem [#allocation6], %s161
        %v164 = vld [vmem:[%s142] sm:$0xff]
        %v165 = vld [vmem:[%s142 + $0x8] sm:$0xff]
        %v166 = vld [vmem:[%s142 + $0x10] sm:$0xff]
        %v167 = vld [vmem:[%s142 + $0x18] sm:$0xff]
        %v168 = vpack.c.bf16 %v166, %v164
        %v169 = vpack.c.bf16 %v167, %v165
        %170 = vmatprep.subr.bf16.mxu0 %v169
        %171 = vmatpush1.bf16.xpose.msra.mxu0 %v168
        %172 = vmatprep.subr.bf16.mxu0 0
        %173 = vmatpush1.bf16.xpose.msra.mxu0 0
        %174 = vmatprep.subr.bf16.mxu0 0
        %175 = vmatpush1.bf16.xpose.msra.mxu0 0
        %176 = vmatprep.subr.bf16.mxu0 0
        %177 = vmatpush1.bf16.xpose.msra.mxu0 0
        %178 = vmatprep.subr.bf16.mxu0 0
        %179 = vmatpush1.bf16.xpose.msra.mxu0 0
        %180 = vmatprep.subr.bf16.mxu0 0
        %181 = vmatpush1.bf16.xpose.msra.mxu0 0
        %182 = vmatprep.subr.bf16.mxu0 0
        %183 = vmatpush1.bf16.xpose.msra.mxu0 0
        %184 = vmatprep.subr.bf16.mxu0 0
        %185 = vmatpush1.bf16.xpose.msra.mxu0 0
        %186 = vmatprep.subr.bf16.mxu0 0
        %187 = vmatpush1.bf16.xpose.msra.mxu0 0
        %188 = vmatprep.subr.bf16.mxu0 0
        %189 = vmatpush1.bf16.xpose.msra.mxu0 0
        %190 = vmatprep.subr.bf16.mxu0 0
        %191 = vmatpush1.bf16.xpose.msra.mxu0 0
        %192 = vmatprep.subr.bf16.mxu0 0
        %193 = vmatpush1.bf16.xpose.msra.mxu0 0
        %194 = vmatprep.subr.bf16.mxu0 0
        %195 = vmatpush1.bf16.xpose.msra.mxu0 0
        %196 = vmatprep.subr.bf16.mxu0 0
        %197 = vmatpush1.bf16.xpose.msra.mxu0 0
        %198 = vmatprep.subr.bf16.mxu0 0
        %199 = vmatpush1.bf16.xpose.msra.mxu0 0
        %200 = vmatprep.subr.bf16.mxu0 0
        %201 = vmatpush1.bf16.xpose.msra.mxu0 0
        %202 = vmatprep.mubr.bf16.mxu0 %v169
        %203 = vmatmul.mubr.bf16.gmra.mrb[0].mxu0 %v168
        %v204 = vpop.f32.mrb[0].mxu0
        %v205 = vadd.f32 0.0, %v204
        %v206 = vpop.f32.mrb[0].mxu0
        %v207 = vpop.f32.mrb[0].mxu0
        %v208 = vadd.f32 0.0, %v207
        %v209 = vpop.f32.mrb[0].mxu0
        %210 = vdwg.mxu0
        %v211 = vlaneseq
        %v212 = vand.u32 %v211, 127
        %vm213 = vcmp.lt.s32.totalorder %v212, 4
        %v214 = vsel %vm213, %v205, inf
        %v215 = vsel %vm213, %v208, inf
        %vm216 = vcmask 130048
        %v217 = vsel %vm216, %v214, inf
        %218 = vmin.xlane.f32.xlu0 %v217
        %v219 = vpop.xlane.xlu0 %218
        %v220 = vsel %vm216, %v215, inf
        %221 = vmin.xlane.f32.xlu0 %v220
        %v222 = vpop.xlane.xlu0 %221
        %v223 = vsub.f32 %v219, %v214
        %v224 = vsub.f32 %v222, %v215
        %v225 = vmul.f32 %v223, 1.442695
        %v226 = vpow.pop %v225
        %v227 = vmul.f32 %v224, 1.442695
        %v228 = vpow.pop %v227
        %v229 = vsel %vm216, %v226, 0.0
        %230 = vadd.xlane.f32.xlu0 %v229
        %v231 = vpop.xlane.xlu0 %230
        %v232 = vsel %vm216, %v228, 0.0
        %233 = vadd.xlane.f32.xlu0 %v232
        %v234 = vpop.xlane.xlu0 %233
        %v235 = vrcp.pop %v231
        %v236 = vrcp.pop %v234
        %v237 = vmul.f32 %v226, %v235
        %v238 = vmul.f32 %v228, %v236
        %v239 = vpack.c.bf16 %v238, %v237
        %v241 = vsel %vm216, %v239, 0
        %243 = vmatprep.subr.bf16.mxu0 %v169
        %244 = vmatpush1.bf16.msra.mxu0 %v168
        %245 = vmatprep.subr.bf16.mxu0 0
        %246 = vmatpush1.bf16.msra.mxu0 0
        %247 = vmatprep.subr.bf16.mxu0 0
        %248 = vmatpush1.bf16.msra.mxu0 0
        %249 = vmatprep.subr.bf16.mxu0 0
        %250 = vmatpush1.bf16.msra.mxu0 0
        %251 = vmatprep.subr.bf16.mxu0 0
        %252 = vmatpush1.bf16.msra.mxu0 0
        %253 = vmatprep.subr.bf16.mxu0 0
        %254 = vmatpush1.bf16.msra.mxu0 0
        %255 = vmatprep.subr.bf16.mxu0 0
        %256 = vmatpush1.bf16.msra.mxu0 0
        %257 = vmatprep.subr.bf16.mxu0 0
        %258 = vmatpush1.bf16.msra.mxu0 0
        %259 = vmatprep.subr.bf16.mxu0 0
        %260 = vmatpush1.bf16.msra.mxu0 0
        %261 = vmatprep.subr.bf16.mxu0 0
        %262 = vmatpush1.bf16.msra.mxu0 0
        %263 = vmatprep.subr.bf16.mxu0 0
        %264 = vmatpush1.bf16.msra.mxu0 0
        %265 = vmatprep.subr.bf16.mxu0 0
        %266 = vmatpush1.bf16.msra.mxu0 0
        %267 = vmatprep.subr.bf16.mxu0 0
        %268 = vmatpush1.bf16.msra.mxu0 0
        %269 = vmatprep.subr.bf16.mxu0 0
        %270 = vmatpush1.bf16.msra.mxu0 0
        %271 = vmatprep.subr.bf16.mxu0 0
        %272 = vmatpush1.bf16.msra.mxu0 0
        %273 = vmatprep.subr.bf16.mxu0 0
        %274 = vmatpush1.bf16.msra.mxu0 0
        %275 = vmatprep.mubr.bf16.mxu0 0
        %276 = vmatmul.mubr.bf16.gmra.mrb[0].mxu0 %v241
        %v277 = vpop.f32.mrb[0].mxu0
        %v278 = vadd.f32 0.0, %v277
        %v279 = vpop.f32.mrb[0].mxu0
        %v280 = vadd.f32 0.0, %v279
        %v281 = vpop.f32.mrb[0].mxu0
        %v282 = vadd.f32 0.0, %v281
        %v283 = vpop.f32.mrb[0].mxu0
        %v284 = vadd.f32 0.0, %v283
        %285 = vdwg.mxu0
        %s286 = sld [smem:[#allocation2]]
        %v287 = vstv %s286
        %v288 = vmul.f32 %v287, %v278
        %v289 = vmul.f32 %v287, %v280
        %v290 = vmul.f32 %v287, %v282
        %v291 = vmul.f32 %v287, %v284
        %v292 = vadd.f32 %v288, %v164
        %v293 = vadd.f32 %v289, %v165
        %v294 = vadd.f32 %v290, %v166
        %v295 = vadd.f32 %v291, %v167
        %296 = vst [vmem:[%s162] sm:$0xff] %v292
        %297 = vst [vmem:[%s162 + $0x8] sm:$0xff] %v293
        %298 = vst [vmem:[%s162 + $0x10] sm:$0xff] %v294
        %299 = vst [vmem:[%s162 + $0x18] sm:$0xff] %v295
        %s300 = sand.u32 %s75, 1
        %s301 = scalar_lea.sflag [#allocation5], %s300
        %s302 = sand.u32 %s75, 1
        %s303 = smul.addr %s302, 32
        %s304 = scalar_lea.vmem [#allocation6], %s303
        // Predicated region
        $region33: #{tpu_custom_call.1} parent=27 // pred_check
          %p305 = pneg %p85
        $region34: #{tpu_custom_call.1} parent=27 // pred_check_branch
          %307 = sbr.rel (%p305) target = $region36
        $region35: #{tpu_custom_call.1} parent=27 // pred_region
          %s309 = ssub.s32 512, 512
          %310 = vsyncadd %s301, %s309
          %s311 = smul.addr %s20, 4
          %s312 = smul.addr %s311, 128
          %s313 = scalar_lea.hbm %s2, %s312
          %s314 = sshll.u32 %s304, 4
          %s315 = int_to_ptr.vmem [resolvable:$true] %s314
          %320 = dma.vmem_to_hbm [thread:$0]  %s315, 512, %s313, %s301, 256, 256, 16
        $region36: #{tpu_custom_call.1} parent=27 // pred_fallthru
          _
      $region28: #{tpu_custom_call.1} parent=5 // pred_fallthru
        _
      %p321 = scmp.le.s32.totalorder 2, %s15
      // Predicated region
      $region37: #{tpu_custom_call.1} parent=5 // pred_check
        %p322 = pneg %p321
      $region38: #{tpu_custom_call.1} parent=5 // pred_check_branch
        %324 = sbr.rel (%p322) target = $region40
      $region39: #{tpu_custom_call.1} parent=5 // pred_region
        %s325 = ssub.s32 %s15, 2
        // Predicated region
        $region41: #{tpu_custom_call.1} parent=39 // pred_check
          %p326 = pneg %p91
        $region42: #{tpu_custom_call.1} parent=39 // pred_check_branch
          %328 = sbr.rel (%p326) target = $region44
        $region43: #{tpu_custom_call.1} parent=39 // pred_region
          %s329 = sand.u32 %s76, 1
          %s330 = scalar_lea.sflag [#allocation5], %s329
          %s331 = sand.u32 %s76, 1
          %s332 = smul.addr %s331, 32
          %s333 = scalar_lea.vmem [#allocation6], %s332
          %334 = dma.done %s330, 512
        $region44: #{tpu_custom_call.1} parent=39 // pred_fallthru
          _
      $region40: #{tpu_custom_call.1} parent=5 // pred_fallthru
        _
    $region6: #{tpu_custom_call.1} parent=1 // loop_footer
      %s19 = sadd.s32 1, %s15
    $region7: #{tpu_custom_call.1} parent=1 // loop_footer_branch
      %14 = sbr.rel target = $region3
    $region8: #{tpu_custom_call.1} parent=1 // loop_exit
      _
    %335 = vsyncpa [#allocation4], 1
    %s336 = scalar_lea.sflag [#allocation4], 1
    %337 = vsyncpa %s336, 1
    %338 = vsyncpa [#allocation5], 1
    %s339 = scalar_lea.sflag [#allocation5], 1
    %340 = vsyncpa %s339, 1

</llo_original>
